<compile_context>
chip_gen: v7x
topology: tpu7x:2x2x1
jax: 0.10.0
libtpu: 0.0.40
codegen_flags: <defaults>
</compile_context>

<pallas_src>
import jax
import jax.numpy as jnp
from jax.experimental import pallas as pl
from jax.experimental.pallas import tpu as pltpu

LATENT_DIM = 128
NUM_CLASSES = 10
PAD_CLASSES = 128                      # lane-dense padded logits head
OUT_WIDTH = LATENT_DIM + PAD_CLASSES   # fused [z | y_pad] slab = 256 lanes
HIDDEN = 256
IN_FEATURES = 1 * 28 * 28              # MNIST C*H*W = 784
MAX_TB = 2048                          # batch rows per grid step (cap)


def _tst_kernel(x_ref, w1_ref, b1_ref, w2_ref, b2_ref, w34_ref, b34_ref, out_ref):
    """Fused 3-matmul encoder+decoder for one batch tile.

    x_ref  : [TB, 784] f32  (cast to bf16 in-kernel; avoids a wrapper HBM pass)
    w1     : [784, 256] bf16   b1  : [1, 256] f32
    w2     : [256, 256] bf16   b2  : [1, 256] f32
    w34    : [256, 256] bf16   b34 : [1, 256] f32   (fused [w3 | w3@w4_pad])
    out    : [TB, 256] f32     out[:, :128] = z, out[:, 128:138] = logits
    bf16 MXU operands, fp32 accumulation.
    """
    x = x_ref[...].astype(jnp.bfloat16)
    h1 = jnp.dot(x, w1_ref[...], preferred_element_type=jnp.float32) + b1_ref[...]
    h1 = jnp.maximum(h1, 0.0).astype(jnp.bfloat16)
    h2 = jnp.dot(h1, w2_ref[...], preferred_element_type=jnp.float32) + b2_ref[...]
    h2 = jnp.maximum(h2, 0.0).astype(jnp.bfloat16)
    out = jnp.dot(h2, w34_ref[...], preferred_element_type=jnp.float32) + b34_ref[...]
    out_ref[...] = out.astype(out_ref.dtype)


def init_params(key):
    """Deterministic synthetic fp32 parameters (Kaiming-ish scaling)."""
    ks = jax.random.split(key, 4)

    def linear(k, fan_in, fan_out):
        w = jax.random.normal(k, (fan_in, fan_out), jnp.float32) * (fan_in ** -0.5)
        b = jnp.zeros((1, fan_out), jnp.float32)
        return w, b

    w1, b1 = linear(ks[0], IN_FEATURES, HIDDEN)
    w2, b2 = linear(ks[1], HIDDEN, HIDDEN)
    w3, b3 = linear(ks[2], HIDDEN, LATENT_DIM)
    w4, b4 = linear(ks[3], LATENT_DIM, NUM_CLASSES)
    return (w1, b1, w2, b2, w3, b3, w4, b4)


def prepare_params(params):
    """One-time weight preparation (hoisted out of the per-forward path).

    Builds bf16 matmul operands and the fused decoder:
        [z | y] = h2 @ [w3 | w3 @ w4_pad] + [b3 | b3 @ w4_pad + b4_pad]
    The w3 @ w4 product is formed in f32, then cast to bf16.
    """
    w1, b1, w2, b2, w3, b3, w4, b4 = params
    w4p = jnp.zeros((LATENT_DIM, PAD_CLASSES), jnp.float32).at[:, :NUM_CLASSES].set(w4)
    b4p = jnp.zeros((1, PAD_CLASSES), jnp.float32).at[:, :NUM_CLASSES].set(b4)
    w34 = jnp.concatenate([w3, w3 @ w4p], axis=1)           # [256, 256] f32
    b34 = jnp.concatenate([b3, b3 @ w4p + b4p], axis=1)     # [1, 256] f32
    return (w1.astype(jnp.bfloat16), b1,
            w2.astype(jnp.bfloat16), b2,
            w34.astype(jnp.bfloat16), b34)


@jax.jit
def tst_forward(x, prepared):
    """x: [B, 1, 28, 28] float32 (NCHW). Returns (y [B,10] f32, z [B,128] f32)."""
    w1b, b1, w2b, b2, w34b, b34 = prepared
    B = x.shape[0]
    x_flat = x.reshape(B, -1)                      # == torch.flatten(x, 1); stays f32

    # Pad batch only to a sublane multiple (8). Ragged last tile handled by the
    # pl.cdiv grid (edge blocks are masked/clamped by the Pallas pipeline).
    B8 = ((B + 7) // 8) * 8
    if B8 != B:
        x_flat = jnp.pad(x_flat, ((0, B8 - B), (0, 0)))

    # Tile ~half the batch (rounded to 8) so the grid has >= 2 steps when it can
    # (v7x megacore), capped at MAX_TB for VMEM.
    TB = min(MAX_TB, max(8, (((B8 + 1) // 2 + 7) // 8) * 8))
    grid = (pl.cdiv(B8, TB),)

    row = lambda i: (i, 0)      # streamed per batch tile
    const = lambda i: (0, 0)    # resident across all grid steps

    flops = 2 * B8 * (IN_FEATURES * HIDDEN + HIDDEN * HIDDEN + HIDDEN * OUT_WIDTH)
    bytes_accessed = (
        B8 * IN_FEATURES * 4                                            # x (f32)
        + 2 * (IN_FEATURES * HIDDEN + HIDDEN * HIDDEN + HIDDEN * OUT_WIDTH)  # weights bf16
        + 4 * (HIDDEN + HIDDEN + OUT_WIDTH)                             # biases f32
        + B8 * OUT_WIDTH * 4                                            # fused output f32
    )

    out = pl.pallas_call(
        _tst_kernel,
        out_shape=jax.ShapeDtypeStruct((B8, OUT_WIDTH), jnp.float32),
        grid_spec=pltpu.PrefetchScalarGridSpec(
            num_scalar_prefetch=0,
            grid=grid,
            in_specs=[
                pl.BlockSpec((TB, IN_FEATURES), row),         # x tile (f32)
                pl.BlockSpec((IN_FEATURES, HIDDEN), const),   # w1
                pl.BlockSpec((1, HIDDEN), const),             # b1
                pl.BlockSpec((HIDDEN, HIDDEN), const),        # w2
                pl.BlockSpec((1, HIDDEN), const),             # b2
                pl.BlockSpec((HIDDEN, OUT_WIDTH), const),     # fused w34
                pl.BlockSpec((1, OUT_WIDTH), const),          # fused b34
            ],
            out_specs=pl.BlockSpec((TB, OUT_WIDTH), row),     # [z | padded logits]
        ),
        compiler_params=pltpu.CompilerParams(
            dimension_semantics=("parallel",),
            vmem_limit_bytes=48 << 20,
        ),
        cost_estimate=pl.CostEstimate(
            flops=flops, transcendentals=0, bytes_accessed=bytes_accessed),
    )(x_flat, w1b, b1, w2b, b2, w34b, b34)

    y = out[:B, LATENT_DIM:LATENT_DIM + NUM_CLASSES]
    z = out[:B, :LATENT_DIM]
    return y, z


def _reference_forward_f32(x, params):
    """Pure-JAX fp32 reference (PyTorch module semantics)."""
    w1, b1, w2, b2, w3, b3, w4, b4 = params
    h = x.reshape(x.shape[0], -1)
    h = jnp.maximum(h @ w1 + b1, 0.0)
    h = jnp.maximum(h @ w2 + b2, 0.0)
    z = h @ w3 + b3
    y = z @ w4 + b4
    return y, z


def _reference_forward_kernel_math(x, params):
    """Pure-JAX reference mirroring the kernel's bf16-operand / fused-decoder math."""
    w1, b1, w2, b2, w3, b3, w4, b4 = params
    bf, f32 = jnp.bfloat16, jnp.float32
    h = x.reshape(x.shape[0], -1).astype(bf)
    h = jnp.maximum(jnp.dot(h, w1.astype(bf), preferred_element_type=f32) + b1, 0.0).astype(bf)
    h = jnp.maximum(jnp.dot(h, w2.astype(bf), preferred_element_type=f32) + b2, 0.0).astype(bf)
    z = jnp.dot(h, w3.astype(bf), preferred_element_type=f32) + b3
    y = jnp.dot(h, (w3 @ w4).astype(bf), preferred_element_type=f32) + (b3 @ w4 + b4)
    return y, z


if __name__ == "__main__":
    key = jax.random.PRNGKey(0)
    k_x, k_p = jax.random.split(key)

    x = jax.random.normal(k_x, (2, 1, 28, 28), jnp.float32)  # batch=2 MNIST
    params = init_params(k_p)
    prepared = prepare_params(params)

    y, z = tst_forward(x, prepared)
    jax.block_until_ready((y, z))

    assert y.shape == (2, NUM_CLASSES) and z.shape == (2, LATENT_DIM)

    # Tight check against a reference with identical bf16-operand / fused math.
    y_km, z_km = _reference_forward_kernel_math(x, params)
    assert jnp.allclose(y, y_km, atol=1e-3, rtol=1e-3)
    assert jnp.allclose(z, z_km, atol=1e-3, rtol=1e-3)

    # Loose check against the pure fp32 module semantics (bf16 operand rounding).
    y_f32, z_f32 = _reference_forward_f32(x, params)
    assert jnp.allclose(y, y_f32, atol=1e-1, rtol=1e-1)
    assert jnp.allclose(z, z_f32, atol=1e-1, rtol=1e-1)

    print("KERNEL_OK")
</pallas_src>

<mosaic_0001>
module attributes {stable_mosaic.version = 11 : i64} {
  func.func @_tst_kernel(%arg0: i32, %arg1: memref<8x784xf32, #tpu.memory_space<vmem>>, %arg2: memref<784x256xbf16, #tpu.memory_space<vmem>>, %arg3: memref<1x256xf32, #tpu.memory_space<vmem>>, %arg4: memref<256x256xbf16, #tpu.memory_space<vmem>>, %arg5: memref<1x256xf32, #tpu.memory_space<vmem>>, %arg6: memref<256x256xbf16, #tpu.memory_space<vmem>>, %arg7: memref<1x256xf32, #tpu.memory_space<vmem>>, %arg8: memref<8x256xf32, #tpu.memory_space<vmem>>) attributes {dimension_semantics = [#tpu.dimension_semantics<parallel>], iteration_bounds = array<i64: 1>, scalar_prefetch = 0 : i64, scratch_operands = 0 : i64, tpu.core_type = #tpu.core_type<tc>, window_params = [{transform_indices = @transform_0, window_bounds = array<i64: 8, 784>}, {pipeline_mode = #tpu.pipeline_mode<synchronous>, transform_indices = @transform_1, window_bounds = array<i64: 784, 256>}, {pipeline_mode = #tpu.pipeline_mode<synchronous>, transform_indices = @transform_2, window_bounds = array<i64: 1, 256>}, {pipeline_mode = #tpu.pipeline_mode<synchronous>, transform_indices = @transform_3, window_bounds = array<i64: 256, 256>}, {pipeline_mode = #tpu.pipeline_mode<synchronous>, transform_indices = @transform_4, window_bounds = array<i64: 1, 256>}, {pipeline_mode = #tpu.pipeline_mode<synchronous>, transform_indices = @transform_5, window_bounds = array<i64: 256, 256>}, {pipeline_mode = #tpu.pipeline_mode<synchronous>, transform_indices = @transform_6, window_bounds = array<i64: 1, 256>}, {transform_indices = @transform_7, window_bounds = array<i64: 8, 256>}]} {
    %c0 = arith.constant 0 : index
    %c0_0 = arith.constant 0 : index
    %0 = vector.load %arg1[%c0, %c0_0] : memref<8x784xf32, #tpu.memory_space<vmem>>, vector<8x784xf32>
    %1 = arith.truncf %0 : vector<8x784xf32> to vector<8x784xbf16>
    %c0_1 = arith.constant 0 : index
    %c0_2 = arith.constant 0 : index
    %2 = vector.load %arg2[%c0_1, %c0_2] : memref<784x256xbf16, #tpu.memory_space<vmem>>, vector<784x256xbf16>
    %cst = arith.constant dense<0.000000e+00> : vector<8x256xf32>
    %3 = tpu.matmul %1, %2, %cst {dimension_numbers = #tpu.dot_dimension_numbers<[1], [0], [0], [1], [0, 0, 1, 1], [], []>} : vector<8x784xbf16>, vector<784x256xbf16>, vector<8x256xf32> -> vector<8x256xf32>
    %c0_3 = arith.constant 0 : index
    %c0_4 = arith.constant 0 : index
    %4 = vector.load %arg3[%c0_3, %c0_4] : memref<1x256xf32, #tpu.memory_space<vmem>>, vector<1x256xf32>
    %5 = vector.broadcast %4 : vector<1x256xf32> to vector<8x256xf32>
    %6 = arith.addf %3, %5 : vector<8x256xf32>
    %cst_5 = arith.constant 0.000000e+00 : f32
    %7 = vector.broadcast %cst_5 : f32 to vector<8x256xf32>
    %8 = arith.maximumf %6, %7 : vector<8x256xf32>
    %9 = arith.truncf %8 : vector<8x256xf32> to vector<8x256xbf16>
    %c0_6 = arith.constant 0 : index
    %c0_7 = arith.constant 0 : index
    %10 = vector.load %arg4[%c0_6, %c0_7] : memref<256x256xbf16, #tpu.memory_space<vmem>>, vector<256x256xbf16>
    %cst_8 = arith.constant dense<0.000000e+00> : vector<8x256xf32>
    %11 = tpu.matmul %9, %10, %cst_8 {dimension_numbers = #tpu.dot_dimension_numbers<[1], [0], [0], [1], [0, 0, 1, 1], [], []>} : vector<8x256xbf16>, vector<256x256xbf16>, vector<8x256xf32> -> vector<8x256xf32>
    %c0_9 = arith.constant 0 : index
    %c0_10 = arith.constant 0 : index
    %12 = vector.load %arg5[%c0_9, %c0_10] : memref<1x256xf32, #tpu.memory_space<vmem>>, vector<1x256xf32>
    %13 = vector.broadcast %12 : vector<1x256xf32> to vector<8x256xf32>
    %14 = arith.addf %11, %13 : vector<8x256xf32>
    %cst_11 = arith.constant 0.000000e+00 : f32
    %15 = vector.broadcast %cst_11 : f32 to vector<8x256xf32>
    %16 = arith.maximumf %14, %15 : vector<8x256xf32>
    %17 = arith.truncf %16 : vector<8x256xf32> to vector<8x256xbf16>
    %c0_12 = arith.constant 0 : index
    %c0_13 = arith.constant 0 : index
    %18 = vector.load %arg6[%c0_12, %c0_13] : memref<256x256xbf16, #tpu.memory_space<vmem>>, vector<256x256xbf16>
    %cst_14 = arith.constant dense<0.000000e+00> : vector<8x256xf32>
    %19 = tpu.matmul %17, %18, %cst_14 {dimension_numbers = #tpu.dot_dimension_numbers<[1], [0], [0], [1], [0, 0, 1, 1], [], []>} : vector<8x256xbf16>, vector<256x256xbf16>, vector<8x256xf32> -> vector<8x256xf32>
    %c0_15 = arith.constant 0 : index
    %c0_16 = arith.constant 0 : index
    %20 = vector.load %arg7[%c0_15, %c0_16] : memref<1x256xf32, #tpu.memory_space<vmem>>, vector<1x256xf32>
    %21 = vector.broadcast %20 : vector<1x256xf32> to vector<8x256xf32>
    %22 = arith.addf %19, %21 : vector<8x256xf32>
    %c0_17 = arith.constant 0 : index
    %c0_18 = arith.constant 0 : index
    %23 = vector.load %arg8[%c0_17, %c0_18] : memref<8x256xf32, #tpu.memory_space<vmem>>, vector<8x256xf32>
    tpu.vector_store %arg8[%c0_17, %c0_18], %22 {strides = array<i32>} : memref<8x256xf32, #tpu.memory_space<vmem>>, vector<8x256xf32>,
    return
  }
  func.func @transform_0(%arg0: i32) -> (i32, i32) {
    %c0_i32 = arith.constant 0 : i32
    %c0_i32_0 = arith.constant 0 : i32
    return %arg0, %c0_i32 : i32, i32
  }
  func.func @transform_1(%arg0: i32) -> (i32, i32) {
    %c0_i32 = arith.constant 0 : i32
    %c0_i32_0 = arith.constant 0 : i32
    %c0_i32_1 = arith.constant 0 : i32
    return %c0_i32, %c0_i32_0 : i32, i32
  }
  func.func @transform_2(%arg0: i32) -> (i32, i32) {
    %c0_i32 = arith.constant 0 : i32
    %c0_i32_0 = arith.constant 0 : i32
    %c0_i32_1 = arith.constant 0 : i32
    return %c0_i32, %c0_i32_0 : i32, i32
  }
  func.func @transform_3(%arg0: i32) -> (i32, i32) {
    %c0_i32 = arith.constant 0 : i32
    %c0_i32_0 = arith.constant 0 : i32
    %c0_i32_1 = arith.constant 0 : i32
    return %c0_i32, %c0_i32_0 : i32, i32
  }
  func.func @transform_4(%arg0: i32) -> (i32, i32) {
    %c0_i32 = arith.constant 0 : i32
    %c0_i32_0 = arith.constant 0 : i32
    %c0_i32_1 = arith.constant 0 : i32
    return %c0_i32, %c0_i32_0 : i32, i32
  }
  func.func @transform_5(%arg0: i32) -> (i32, i32) {
    %c0_i32 = arith.constant 0 : i32
    %c0_i32_0 = arith.constant 0 : i32
    %c0_i32_1 = arith.constant 0 : i32
    return %c0_i32, %c0_i32_0 : i32, i32
  }
  func.func @transform_6(%arg0: i32) -> (i32, i32) {
    %c0_i32 = arith.constant 0 : i32
    %c0_i32_0 = arith.constant 0 : i32
    %c0_i32_1 = arith.constant 0 : i32
    return %c0_i32, %c0_i32_0 : i32, i32
  }
  func.func @transform_7(%arg0: i32) -> (i32, i32) {
    %c0_i32 = arith.constant 0 : i32
    %c0_i32_0 = arith.constant 0 : i32
    return %arg0, %c0_i32 : i32, i32
  }
}

</mosaic_0001>

<llo_original>
// kernel: tst_forward.1
$region0: #{tst_forward.1}
  #allocation0 [shape = 'u32[]', space=smem, size = 0x4, offset = 0x4, fixed_abs, tag = 'smem constant byte address 0x4 - core index']
  #allocation1 [shape = 'u32[144,128]{1,0:T(1,128)}', space=vmem, size = 0x12000, scoped, tag = 'internal scratch']
  %s0 = inlined_call_operand.vmem [shape: f32[8,784], index: 0, kind: input, shape index: {}]
  %s1 = inlined_call_operand.hbm [shape: bf16[784,256], index: 1, kind: input, shape index: {}]
  %s2 = inlined_call_operand.vmem [shape: f32[1,256], index: 2, kind: input, shape index: {}]
  %s3 = inlined_call_operand.vmem [shape: bf16[256,256], index: 3, kind: input, shape index: {}]
  %s4 = inlined_call_operand.vmem [shape: f32[1,256], index: 4, kind: input, shape index: {}]
  %s5 = inlined_call_operand.hbm [shape: bf16[256,256], index: 5, kind: input, shape index: {}]
  %s6 = inlined_call_operand.vmem [shape: f32[1,256], index: 6, kind: input, shape index: {}]
  %s7 = inlined_call_operand.vmem [shape: f32[8,256], index: 7, kind: output, shape index: {}]
  %s8 = sld [smem:[#allocation0]]
  $region46: #{tst_forward.1} parent=0
    _
  %s10 = ssub.s32 1, %s8
  %s11 = scalar_select 0, %s10, %s8
  $region1: #{tst_forward.1} parent=0
    #allocation2 [shape = 'u8[401408]{0}', space=vmem, size = 0x62000, scoped, tag = 'input window, operand 1, single buffered']
    #allocation3 [shape = 's32[1]{0}', space=sflag, size = 0x4, scoped, tag = 'scoped memory for tst_forward.1']
    #allocation4 [shape = 'u8[131072]{0}', space=vmem, size = 0x20000, scoped, tag = 'input window, operand 5, single buffered']
    #allocation5 [shape = 's32[1]{0}', space=sflag, size = 0x4, scoped, tag = 'scoped memory for tst_forward.1']
    %12 = vsyncpa [#allocation3], 0
    %13 = vsyncpa [#allocation5], 0
    // Predicated region
    $region2: #{tst_forward.1} parent=1 // pred_check
      _
    $region3: #{tst_forward.1} parent=1 // pred_check_branch
      %15 = sbr.rel (0) target = $region5
    $region4: #{tst_forward.1} parent=1 // pred_region
      _
    $region5: #{tst_forward.1} parent=1 // pred_fallthru
      _
    // Predicated region
    $region6: #{tst_forward.1} parent=1 // pred_check
      _
    $region7: #{tst_forward.1} parent=1 // pred_check_branch
      %17 = sbr.rel (0) target = $region9
    $region8: #{tst_forward.1} parent=1 // pred_region
      %s19 = ssub.s32 12544, 12544
      %20 = vsyncadd [#allocation3], %s19
      %s21 = sshll.u32 [#allocation2], 4
      %s22 = int_to_ptr.vmem [resolvable:$true] %s21
      %27 = dma.hbm_to_vmem [thread:$0]  %s1, 12544, %s22, [#allocation3], 128, 128, 8
    $region9: #{tst_forward.1} parent=1 // pred_fallthru
      _
    // Predicated region
    $region10: #{tst_forward.1} parent=1 // pred_check
      _
    $region11: #{tst_forward.1} parent=1 // pred_check_branch
      %29 = sbr.rel (0) target = $region13
    $region12: #{tst_forward.1} parent=1 // pred_region
      _
    $region13: #{tst_forward.1} parent=1 // pred_fallthru
      _
    // Predicated region
    $region14: #{tst_forward.1} parent=1 // pred_check
      _
    $region15: #{tst_forward.1} parent=1 // pred_check_branch
      %31 = sbr.rel (0) target = $region17
    $region16: #{tst_forward.1} parent=1 // pred_region
      _
    $region17: #{tst_forward.1} parent=1 // pred_fallthru
      _
    // Predicated region
    $region18: #{tst_forward.1} parent=1 // pred_check
      _
    $region19: #{tst_forward.1} parent=1 // pred_check_branch
      %33 = sbr.rel (0) target = $region21
    $region20: #{tst_forward.1} parent=1 // pred_region
      _
    $region21: #{tst_forward.1} parent=1 // pred_fallthru
      _
    // Predicated region
    $region22: #{tst_forward.1} parent=1 // pred_check
      _
    $region23: #{tst_forward.1} parent=1 // pred_check_branch
      %35 = sbr.rel (0) target = $region25
    $region24: #{tst_forward.1} parent=1 // pred_region
      %s37 = ssub.s32 4096, 4096
      %38 = vsyncadd [#allocation5], %s37
      %s39 = sshll.u32 [#allocation4], 4
      %s40 = int_to_ptr.vmem [resolvable:$true] %s39
      %45 = dma.hbm_to_vmem [thread:$0]  %s5, 4096, %s40, [#allocation5], 128, 128, 8
    $region25: #{tst_forward.1} parent=1 // pred_fallthru
      _
    // Predicated region
    $region26: #{tst_forward.1} parent=1 // pred_check
      _
    $region27: #{tst_forward.1} parent=1 // pred_check_branch
      %47 = sbr.rel (0) target = $region29
    $region28: #{tst_forward.1} parent=1 // pred_region
      _
    $region29: #{tst_forward.1} parent=1 // pred_fallthru
      _
    // Predicated region
    $region30: #{tst_forward.1} parent=1 // pred_check
      _
    $region31: #{tst_forward.1} parent=1 // pred_check_branch
      %49 = sbr.rel (0) target = $region33
    $region32: #{tst_forward.1} parent=1 // pred_region
      %50 = dma.done [#allocation3], 12544
    $region33: #{tst_forward.1} parent=1 // pred_fallthru
      _
    // Predicated region
    $region34: #{tst_forward.1} parent=1 // pred_check
      _
    $region35: #{tst_forward.1} parent=1 // pred_check_branch
      %52 = sbr.rel (0) target = $region37
    $region36: #{tst_forward.1} parent=1 // pred_region
      %53 = dma.done [#allocation5], 4096
    $region37: #{tst_forward.1} parent=1 // pred_fallthru
      _
    %v55 = vld [vmem:[%s0] sm:$0xff]
    %v56 = vld [vmem:[%s0 + $0x8] sm:$0xff]
    %v57 = vld [vmem:[%s0 + $0x10] sm:$0xff]
    %v58 = vld [vmem:[%s0 + $0x18] sm:$0xff]
    %v59 = vld [vmem:[%s0 + $0x20] sm:$0xff]
    %v60 = vld [vmem:[%s0 + $0x28] sm:$0xff]
    %v61 = vld [vmem:[%s0 + $0x30] sm:$0xff]
    %v62 = vpack.c.bf16 %v55, %v55
    %v63 = vpack.c.bf16 %v56, %v56
    %v64 = vpack.c.bf16 %v57, %v57
    %v65 = vpack.c.bf16 %v58, %v58
    %v66 = vpack.c.bf16 %v59, %v59
    %v67 = vpack.c.bf16 %v60, %v60
    %v68 = vpack.c.bf16 %v61, %v61
    %v69 = vld [vmem:[#allocation2] sm:$0xff]
    %v70 = vld [vmem:[#allocation2 + $0x8] sm:$0xff]
    %v71 = vld [vmem:[#allocation2 + $0x10] sm:$0xff]
    %v72 = vld [vmem:[#allocation2 + $0x18] sm:$0xff]
    %v73 = vld [vmem:[#allocation2 + $0x20] sm:$0xff]
    %v74 = vld [vmem:[#allocation2 + $0x28] sm:$0xff]
    %v75 = vld [vmem:[#allocation2 + $0x30] sm:$0xff]
    %v76 = vld [vmem:[#allocation2 + $0x38] sm:$0xff]
    %v77 = vld [vmem:[#allocation2 + $0x40] sm:$0xff]
    %v78 = vld [vmem:[#allocation2 + $0x48] sm:$0xff]
    %v79 = vld [vmem:[#allocation2 + $0x50] sm:$0xff]
    %v80 = vld [vmem:[#allocation2 + $0x58] sm:$0xff]
    %v81 = vld [vmem:[#allocation2 + $0x60] sm:$0xff]
    %v82 = vld [vmem:[#allocation2 + $0x68] sm:$0xff]
    %v83 = vld [vmem:[#allocation2 + $0x70] sm:$0xff]
    %v84 = vld [vmem:[#allocation2 + $0x78] sm:$0xff]
    %v85 = vld [vmem:[#allocation2 + $0x80] sm:$0xff]
    %v86 = vld [vmem:[#allocation2 + $0x88] sm:$0xff]
    %v87 = vld [vmem:[#allocation2 + $0x90] sm:$0xff]
    %v88 = vld [vmem:[#allocation2 + $0x98] sm:$0xff]
    %v89 = vld [vmem:[#allocation2 + $0xa0] sm:$0xff]
    %v90 = vld [vmem:[#allocation2 + $0xa8] sm:$0xff]
    %v91 = vld [vmem:[#allocation2 + $0xb0] sm:$0xff]
    %v92 = vld [vmem:[#allocation2 + $0xb8] sm:$0xff]
    %v93 = vld [vmem:[#allocation2 + $0xc0] sm:$0xff]
    %v94 = vld [vmem:[#allocation2 + $0xc8] sm:$0xff]
    %v95 = vld [vmem:[#allocation2 + $0xd0] sm:$0xff]
    %v96 = vld [vmem:[#allocation2 + $0xd8] sm:$0xff]
    %v97 = vld [vmem:[#allocation2 + $0xe0] sm:$0xff]
    %v98 = vld [vmem:[#allocation2 + $0xe8] sm:$0xff]
    %v99 = vld [vmem:[#allocation2 + $0xf0] sm:$0xff]
    %v100 = vld [vmem:[#allocation2 + $0xf8] sm:$0xff]
    %v101 = vld [vmem:[#allocation2 + $0x100] sm:$0xff]
    %v102 = vld [vmem:[#allocation2 + $0x108] sm:$0xff]
    %v103 = vld [vmem:[#allocation2 + $0x110] sm:$0xff]
    %v104 = vld [vmem:[#allocation2 + $0x118] sm:$0xff]
    %v105 = vld [vmem:[#allocation2 + $0x120] sm:$0xff]
    %v106 = vld [vmem:[#allocation2 + $0x128] sm:$0xff]
    %v107 = vld [vmem:[#allocation2 + $0x130] sm:$0xff]
    %v108 = vld [vmem:[#allocation2 + $0x138] sm:$0xff]
    %v109 = vld [vmem:[#allocation2 + $0x140] sm:$0xff]
    %v110 = vld [vmem:[#allocation2 + $0x148] sm:$0xff]
    %v111 = vld [vmem:[#allocation2 + $0x150] sm:$0xff]
    %v112 = vld [vmem:[#allocation2 + $0x158] sm:$0xff]
    %v113 = vld [vmem:[#allocation2 + $0x160] sm:$0xff]
    %v114 = vld [vmem:[#allocation2 + $0x168] sm:$0xff]
    %v115 = vld [vmem:[#allocation2 + $0x170] sm:$0xff]
    %v116 = vld [vmem:[#allocation2 + $0x178] sm:$0xff]
    %v117 = vld [vmem:[#allocation2 + $0x180] sm:$0xff]
    %v118 = vld [vmem:[#allocation2 + $0x188] sm:$0xff]
    %v119 = vld [vmem:[#allocation2 + $0x190] sm:$0xff]
    %v120 = vld [vmem:[#allocation2 + $0x198] sm:$0xff]
    %v121 = vld [vmem:[#allocation2 + $0x1a0] sm:$0xff]
    %v122 = vld [vmem:[#allocation2 + $0x1a8] sm:$0xff]
    %v123 = vld [vmem:[#allocation2 + $0x1b0] sm:$0xff]
    %v124 = vld [vmem:[#allocation2 + $0x1b8] sm:$0xff]
    %v125 = vld [vmem:[#allocation2 + $0x1c0] sm:$0xff]
    %v126 = vld [vmem:[#allocation2 + $0x1c8] sm:$0xff]
    %v127 = vld [vmem:[#allocation2 + $0x1d0] sm:$0xff]
    %v128 = vld [vmem:[#allocation2 + $0x1d8] sm:$0xff]
    %v129 = vld [vmem:[#allocation2 + $0x1e0] sm:$0xff]
    %v130 = vld [vmem:[#allocation2 + $0x1e8] sm:$0xff]
    %v131 = vld [vmem:[#allocation2 + $0x1f0] sm:$0xff]
    %v132 = vld [vmem:[#allocation2 + $0x1f8] sm:$0xff]
    %v133 = vld [vmem:[#allocation2 + $0x200] sm:$0xff]
    %v134 = vld [vmem:[#allocation2 + $0x208] sm:$0xff]
    %v135 = vld [vmem:[#allocation2 + $0x210] sm:$0xff]
    %v136 = vld [vmem:[#allocation2 + $0x218] sm:$0xff]
    %v137 = vld [vmem:[#allocation2 + $0x220] sm:$0xff]
    %v138 = vld [vmem:[#allocation2 + $0x228] sm:$0xff]
    %v139 = vld [vmem:[#allocation2 + $0x230] sm:$0xff]
    %v140 = vld [vmem:[#allocation2 + $0x238] sm:$0xff]
    %v141 = vld [vmem:[#allocation2 + $0x240] sm:$0xff]
    %v142 = vld [vmem:[#allocation2 + $0x248] sm:$0xff]
    %v143 = vld [vmem:[#allocation2 + $0x250] sm:$0xff]
    %v144 = vld [vmem:[#allocation2 + $0x258] sm:$0xff]
    %v145 = vld [vmem:[#allocation2 + $0x260] sm:$0xff]
    %v146 = vld [vmem:[#allocation2 + $0x268] sm:$0xff]
    %v147 = vld [vmem:[#allocation2 + $0x270] sm:$0xff]
    %v148 = vld [vmem:[#allocation2 + $0x278] sm:$0xff]
    %v149 = vld [vmem:[#allocation2 + $0x280] sm:$0xff]
    %v150 = vld [vmem:[#allocation2 + $0x288] sm:$0xff]
    %v151 = vld [vmem:[#allocation2 + $0x290] sm:$0xff]
    %v152 = vld [vmem:[#allocation2 + $0x298] sm:$0xff]
    %v153 = vld [vmem:[#allocation2 + $0x2a0] sm:$0xff]
    %v154 = vld [vmem:[#allocation2 + $0x2a8] sm:$0xff]
    %v155 = vld [vmem:[#allocation2 + $0x2b0] sm:$0xff]
    %v156 = vld [vmem:[#allocation2 + $0x2b8] sm:$0xff]
    %v157 = vld [vmem:[#allocation2 + $0x2c0] sm:$0xff]
    %v158 = vld [vmem:[#allocation2 + $0x2c8] sm:$0xff]
    %v159 = vld [vmem:[#allocation2 + $0x2d0] sm:$0xff]
    %v160 = vld [vmem:[#allocation2 + $0x2d8] sm:$0xff]
    %v161 = vld [vmem:[#allocation2 + $0x2e0] sm:$0xff]
    %v162 = vld [vmem:[#allocation2 + $0x2e8] sm:$0xff]
    %v163 = vld [vmem:[#allocation2 + $0x2f0] sm:$0xff]
    %v164 = vld [vmem:[#allocation2 + $0x2f8] sm:$0xff]
    %v165 = vld [vmem:[#allocation2 + $0x300] sm:$0xff]
    %v166 = vld [vmem:[#allocation2 + $0x308] sm:$0xff]
    %v167 = vld [vmem:[%s2] sm:$0x3]
    %v169 = vlaneseq
    %v170 = vshrl.u32 %v169, 7
    %v171 = vsub.s32 0, %v170
    %v172 = vrot.slane %v167, %v171
    %v173 = vlaneseq
    %v174 = vshrl.u32 %v173, 7
    %v175 = vsub.s32 1, %v174
    %v176 = vrot.slane %v167, %v175
    %v277 = vunpack.c.l.b16 %v69
    %v278 = vunpack.c.h.b16 %v69
    %v279 = vunpack.c.l.b16 %v70
    %v280 = vunpack.c.h.b16 %v70
    %v281 = vunpack.c.l.b16 %v71
    %v282 = vunpack.c.h.b16 %v71
    %v283 = vunpack.c.l.b16 %v72
    %v284 = vunpack.c.h.b16 %v72
    %v285 = vunpack.c.l.b16 %v73
    %v286 = vunpack.c.h.b16 %v73
    %v287 = vunpack.c.l.b16 %v74
    %v288 = vunpack.c.h.b16 %v74
    %v289 = vunpack.c.l.b16 %v75
    %v290 = vunpack.c.h.b16 %v75
    %v291 = vunpack.c.l.b16 %v76
    %v292 = vunpack.c.h.b16 %v76
    %v293 = vunpack.c.l.b16 %v77
    %v294 = vunpack.c.h.b16 %v77
    %v295 = vunpack.c.l.b16 %v78
    %v296 = vunpack.c.h.b16 %v78
    %v297 = vunpack.c.l.b16 %v79
    %v298 = vunpack.c.h.b16 %v79
    %v299 = vunpack.c.l.b16 %v80
    %v300 = vunpack.c.h.b16 %v80
    %v301 = vunpack.c.l.b16 %v81
    %v302 = vunpack.c.h.b16 %v81
    %v303 = vunpack.c.l.b16 %v82
    %v304 = vunpack.c.h.b16 %v82
    %v305 = vunpack.c.l.b16 %v83
    %v306 = vunpack.c.h.b16 %v83
    %v307 = vunpack.c.l.b16 %v84
    %v308 = vunpack.c.h.b16 %v84
    %v309 = vunpack.c.l.b16 %v85
    %v310 = vunpack.c.h.b16 %v85
    %v311 = vunpack.c.l.b16 %v86
    %v312 = vunpack.c.h.b16 %v86
    %v313 = vunpack.c.l.b16 %v87
    %v314 = vunpack.c.h.b16 %v87
    %v315 = vunpack.c.l.b16 %v88
    %v316 = vunpack.c.h.b16 %v88
    %v317 = vunpack.c.l.b16 %v89
    %v318 = vunpack.c.h.b16 %v89
    %v319 = vunpack.c.l.b16 %v90
    %v320 = vunpack.c.h.b16 %v90
    %v321 = vunpack.c.l.b16 %v91
    %v322 = vunpack.c.h.b16 %v91
    %v323 = vunpack.c.l.b16 %v92
    %v324 = vunpack.c.h.b16 %v92
    %v325 = vunpack.c.l.b16 %v93
    %v326 = vunpack.c.h.b16 %v93
    %v327 = vunpack.c.l.b16 %v94
    %v328 = vunpack.c.h.b16 %v94
    %v329 = vunpack.c.l.b16 %v95
    %v330 = vunpack.c.h.b16 %v95
    %v331 = vunpack.c.l.b16 %v96
    %v332 = vunpack.c.h.b16 %v96
    %v333 = vunpack.c.l.b16 %v97
    %v334 = vunpack.c.h.b16 %v97
    %v335 = vunpack.c.l.b16 %v98
    %v336 = vunpack.c.h.b16 %v98
    %v337 = vunpack.c.l.b16 %v99
    %v338 = vunpack.c.h.b16 %v99
    %v339 = vunpack.c.l.b16 %v100
    %v340 = vunpack.c.h.b16 %v100
    %v341 = vunpack.c.l.b16 %v101
    %v342 = vunpack.c.h.b16 %v101
    %v343 = vunpack.c.l.b16 %v102
    %v344 = vunpack.c.h.b16 %v102
    %v345 = vunpack.c.l.b16 %v103
    %v346 = vunpack.c.h.b16 %v103
    %v347 = vunpack.c.l.b16 %v104
    %v348 = vunpack.c.h.b16 %v104
    %v349 = vunpack.c.l.b16 %v105
    %v350 = vunpack.c.h.b16 %v105
    %v351 = vunpack.c.l.b16 %v106
    %v352 = vunpack.c.h.b16 %v106
    %v353 = vunpack.c.l.b16 %v107
    %v354 = vunpack.c.h.b16 %v107
    %v355 = vunpack.c.l.b16 %v108
    %v356 = vunpack.c.h.b16 %v108
    %v357 = vunpack.c.l.b16 %v109
    %v358 = vunpack.c.h.b16 %v109
    %v359 = vunpack.c.l.b16 %v110
    %v360 = vunpack.c.h.b16 %v110
    %v361 = vunpack.c.l.b16 %v111
    %v362 = vunpack.c.h.b16 %v111
    %v363 = vunpack.c.l.b16 %v112
    %v364 = vunpack.c.h.b16 %v112
    %v365 = vunpack.c.l.b16 %v113
    %v366 = vunpack.c.h.b16 %v113
    %v367 = vunpack.c.l.b16 %v114
    %v368 = vunpack.c.h.b16 %v114
    %v369 = vunpack.c.l.b16 %v115
    %v370 = vunpack.c.h.b16 %v115
    %v371 = vunpack.c.l.b16 %v116
    %v372 = vunpack.c.h.b16 %v116
    %v373 = vunpack.c.l.b16 %v117
    %v374 = vunpack.c.h.b16 %v117
    %v375 = vunpack.c.l.b16 %v118
    %v376 = vunpack.c.h.b16 %v118
    %v377 = vunpack.c.l.b16 %v119
    %v378 = vunpack.c.h.b16 %v119
    %v379 = vunpack.c.l.b16 %v120
    %v380 = vunpack.c.h.b16 %v120
    %v381 = vunpack.c.l.b16 %v121
    %v382 = vunpack.c.h.b16 %v121
    %v383 = vunpack.c.l.b16 %v122
    %v384 = vunpack.c.h.b16 %v122
    %v385 = vunpack.c.l.b16 %v123
    %v386 = vunpack.c.h.b16 %v123
    %v387 = vunpack.c.l.b16 %v124
    %v388 = vunpack.c.h.b16 %v124
    %v389 = vunpack.c.l.b16 %v125
    %v390 = vunpack.c.h.b16 %v125
    %v391 = vunpack.c.l.b16 %v126
    %v392 = vunpack.c.h.b16 %v126
    %v393 = vunpack.c.l.b16 %v127
    %v394 = vunpack.c.h.b16 %v127
    %v395 = vunpack.c.l.b16 %v128
    %v396 = vunpack.c.h.b16 %v128
    %v397 = vunpack.c.l.b16 %v129
    %v398 = vunpack.c.h.b16 %v129
    %v399 = vunpack.c.l.b16 %v130
    %v400 = vunpack.c.h.b16 %v130
    %v401 = vunpack.c.l.b16 %v131
    %v402 = vunpack.c.h.b16 %v131
    %v403 = vunpack.c.l.b16 %v132
    %v404 = vunpack.c.h.b16 %v132
    %v405 = vunpack.c.l.b16 %v133
    %v406 = vunpack.c.h.b16 %v133
    %v407 = vunpack.c.l.b16 %v134
    %v408 = vunpack.c.h.b16 %v134
    %v409 = vunpack.c.l.b16 %v135
    %v410 = vunpack.c.h.b16 %v135
    %v411 = vunpack.c.l.b16 %v136
    %v412 = vunpack.c.h.b16 %v136
    %v413 = vunpack.c.l.b16 %v137
    %v414 = vunpack.c.h.b16 %v137
    %v415 = vunpack.c.l.b16 %v138
    %v416 = vunpack.c.h.b16 %v138
    %v417 = vunpack.c.l.b16 %v139
    %v418 = vunpack.c.h.b16 %v139
    %v419 = vunpack.c.l.b16 %v140
    %v420 = vunpack.c.h.b16 %v140
    %v421 = vunpack.c.l.b16 %v141
    %v422 = vunpack.c.h.b16 %v141
    %v423 = vunpack.c.l.b16 %v142
    %v424 = vunpack.c.h.b16 %v142
    %v425 = vunpack.c.l.b16 %v143
    %v426 = vunpack.c.h.b16 %v143
    %v427 = vunpack.c.l.b16 %v144
    %v428 = vunpack.c.h.b16 %v144
    %v429 = vunpack.c.l.b16 %v145
    %v430 = vunpack.c.h.b16 %v145
    %v431 = vunpack.c.l.b16 %v146
    %v432 = vunpack.c.h.b16 %v146
    %v433 = vunpack.c.l.b16 %v147
    %v434 = vunpack.c.h.b16 %v147
    %v435 = vunpack.c.l.b16 %v148
    %v436 = vunpack.c.h.b16 %v148
    %v437 = vunpack.c.l.b16 %v149
    %v438 = vunpack.c.h.b16 %v149
    %v439 = vunpack.c.l.b16 %v150
    %v440 = vunpack.c.h.b16 %v150
    %v441 = vunpack.c.l.b16 %v151
    %v442 = vunpack.c.h.b16 %v151
    %v443 = vunpack.c.l.b16 %v152
    %v444 = vunpack.c.h.b16 %v152
    %v445 = vunpack.c.l.b16 %v153
    %v446 = vunpack.c.h.b16 %v153
    %v447 = vunpack.c.l.b16 %v154
    %v448 = vunpack.c.h.b16 %v154
    %v449 = vunpack.c.l.b16 %v155
    %v450 = vunpack.c.h.b16 %v155
    %v451 = vunpack.c.l.b16 %v156
    %v452 = vunpack.c.h.b16 %v156
    %v453 = vunpack.c.l.b16 %v157
    %v454 = vunpack.c.h.b16 %v157
    %v455 = vunpack.c.l.b16 %v158
    %v456 = vunpack.c.h.b16 %v158
    %v457 = vunpack.c.l.b16 %v159
    %v458 = vunpack.c.h.b16 %v159
    %v459 = vunpack.c.l.b16 %v160
    %v460 = vunpack.c.h.b16 %v160
    %v461 = vunpack.c.l.b16 %v161
    %v462 = vunpack.c.h.b16 %v161
    %v463 = vunpack.c.l.b16 %v162
    %v464 = vunpack.c.h.b16 %v162
    %v465 = vunpack.c.l.b16 %v163
    %v466 = vunpack.c.h.b16 %v163
    %v467 = vunpack.c.l.b16 %v164
    %v468 = vunpack.c.h.b16 %v164
    %v469 = vunpack.c.l.b16 %v165
    %v470 = vunpack.c.h.b16 %v165
    %v471 = vunpack.c.l.b16 %v166
    %v472 = vunpack.c.h.b16 %v166
    %v473 = vpack.c.b16 %v279, %v277
    %v474 = vpack.c.b16 %v280, %v278
    %v475 = vpack.c.b16 %v283, %v281
    %v476 = vpack.c.b16 %v284, %v282
    %v477 = vpack.c.b16 %v287, %v285
    %v478 = vpack.c.b16 %v288, %v286
    %v479 = vpack.c.b16 %v291, %v289
    %v480 = vpack.c.b16 %v292, %v290
    %v481 = vpack.c.b16 %v295, %v293
    %v482 = vpack.c.b16 %v296, %v294
    %v483 = vpack.c.b16 %v299, %v297
    %v484 = vpack.c.b16 %v300, %v298
    %v485 = vpack.c.b16 %v303, %v301
    %v486 = vpack.c.b16 %v304, %v302
    %v487 = vpack.c.b16 %v307, %v305
    %v488 = vpack.c.b16 %v308, %v306
    %v489 = vpack.c.b16 %v311, %v309
    %v490 = vpack.c.b16 %v312, %v310
    %v491 = vpack.c.b16 %v315, %v313
    %v492 = vpack.c.b16 %v316, %v314
    %v493 = vpack.c.b16 %v319, %v317
    %v494 = vpack.c.b16 %v320, %v318
    %v495 = vpack.c.b16 %v323, %v321
    %v496 = vpack.c.b16 %v324, %v322
    %v497 = vpack.c.b16 %v327, %v325
    %v498 = vpack.c.b16 %v328, %v326
    %v499 = vpack.c.b16 %v331, %v329
    %v500 = vpack.c.b16 %v332, %v330
    %v501 = vpack.c.b16 %v335, %v333
    %v502 = vpack.c.b16 %v336, %v334
    %v503 = vpack.c.b16 %v339, %v337
    %v504 = vpack.c.b16 %v340, %v338
    %v505 = vpack.c.b16 %v343, %v341
    %v506 = vpack.c.b16 %v344, %v342
    %v507 = vpack.c.b16 %v347, %v345
    %v508 = vpack.c.b16 %v348, %v346
    %v509 = vpack.c.b16 %v351, %v349
    %v510 = vpack.c.b16 %v352, %v350
    %v511 = vpack.c.b16 %v355, %v353
    %v512 = vpack.c.b16 %v356, %v354
    %v513 = vpack.c.b16 %v359, %v357
    %v514 = vpack.c.b16 %v360, %v358
    %v515 = vpack.c.b16 %v363, %v361
    %v516 = vpack.c.b16 %v364, %v362
    %v517 = vpack.c.b16 %v367, %v365
    %v518 = vpack.c.b16 %v368, %v366
    %v519 = vpack.c.b16 %v371, %v369
    %v520 = vpack.c.b16 %v372, %v370
    %v521 = vpack.c.b16 %v375, %v373
    %v522 = vpack.c.b16 %v376, %v374
    %v523 = vpack.c.b16 %v379, %v377
    %v524 = vpack.c.b16 %v380, %v378
    %v525 = vpack.c.b16 %v383, %v381
    %v526 = vpack.c.b16 %v384, %v382
    %v527 = vpack.c.b16 %v387, %v385
    %v528 = vpack.c.b16 %v388, %v386
    %v529 = vpack.c.b16 %v391, %v389
    %v530 = vpack.c.b16 %v392, %v390
    %v531 = vpack.c.b16 %v395, %v393
    %v532 = vpack.c.b16 %v396, %v394
    %v533 = vpack.c.b16 %v399, %v397
    %v534 = vpack.c.b16 %v400, %v398
    %v535 = vpack.c.b16 %v403, %v401
    %v536 = vpack.c.b16 %v404, %v402
    %v537 = vpack.c.b16 %v407, %v405
    %v538 = vpack.c.b16 %v408, %v406
    %v539 = vpack.c.b16 %v411, %v409
    %v540 = vpack.c.b16 %v412, %v410
    %v541 = vpack.c.b16 %v415, %v413
    %v542 = vpack.c.b16 %v416, %v414
    %v543 = vpack.c.b16 %v419, %v417
    %v544 = vpack.c.b16 %v420, %v418
    %v545 = vpack.c.b16 %v423, %v421
    %v546 = vpack.c.b16 %v424, %v422
    %v547 = vpack.c.b16 %v427, %v425
    %v548 = vpack.c.b16 %v428, %v426
    %v549 = vpack.c.b16 %v431, %v429
    %v550 = vpack.c.b16 %v432, %v430
    %v551 = vpack.c.b16 %v435, %v433
    %v552 = vpack.c.b16 %v436, %v434
    %v553 = vpack.c.b16 %v439, %v437
    %v554 = vpack.c.b16 %v440, %v438
    %v555 = vpack.c.b16 %v443, %v441
    %v556 = vpack.c.b16 %v444, %v442
    %v557 = vpack.c.b16 %v447, %v445
    %v558 = vpack.c.b16 %v448, %v446
    %v559 = vpack.c.b16 %v451, %v449
    %v560 = vpack.c.b16 %v452, %v450
    %v561 = vpack.c.b16 %v455, %v453
    %v562 = vpack.c.b16 %v456, %v454
    %v563 = vpack.c.b16 %v459, %v457
    %v564 = vpack.c.b16 %v460, %v458
    %v565 = vpack.c.b16 %v463, %v461
    %v566 = vpack.c.b16 %v464, %v462
    %v567 = vpack.c.b16 %v467, %v465
    %v568 = vpack.c.b16 %v468, %v466
    %v569 = vpack.c.b16 %v471, %v469
    %v570 = vpack.c.b16 %v472, %v470
    %vm669 = vcmask 130048
    %v671 = vsel %vm669, %v68, 0
    %673 = vmatprep.subr.bf16.mxu0 %v474
    %674 = vmatpush1.bf16.msra.mxu0 %v473
    %675 = vmatprep.subr.bf16.mxu0 %v476
    %676 = vmatpush1.bf16.msra.mxu0 %v475
    %677 = vmatprep.subr.bf16.mxu0 %v478
    %678 = vmatpush1.bf16.msra.mxu0 %v477
    %679 = vmatprep.subr.bf16.mxu0 %v480
    %680 = vmatpush1.bf16.msra.mxu0 %v479
    %681 = vmatprep.subr.bf16.mxu0 %v482
    %682 = vmatpush1.bf16.msra.mxu0 %v481
    %683 = vmatprep.subr.bf16.mxu0 %v484
    %684 = vmatpush1.bf16.msra.mxu0 %v483
    %685 = vmatprep.subr.bf16.mxu0 %v486
    %686 = vmatpush1.bf16.msra.mxu0 %v485
    %687 = vmatprep.subr.bf16.mxu0 %v488
    %688 = vmatpush1.bf16.msra.mxu0 %v487
    %689 = vmatprep.subr.bf16.mxu0 %v490
    %690 = vmatpush1.bf16.msra.mxu0 %v489
    %691 = vmatprep.subr.bf16.mxu0 %v492
    %692 = vmatpush1.bf16.msra.mxu0 %v491
    %693 = vmatprep.subr.bf16.mxu0 %v494
    %694 = vmatpush1.bf16.msra.mxu0 %v493
    %695 = vmatprep.subr.bf16.mxu0 %v496
    %696 = vmatpush1.bf16.msra.mxu0 %v495
    %697 = vmatprep.subr.bf16.mxu0 %v498
    %698 = vmatpush1.bf16.msra.mxu0 %v497
    %699 = vmatprep.subr.bf16.mxu0 %v500
    %700 = vmatpush1.bf16.msra.mxu0 %v499
    %701 = vmatprep.subr.bf16.mxu0 %v502
    %702 = vmatpush1.bf16.msra.mxu0 %v501
    %703 = vmatprep.subr.bf16.mxu0 %v504
    %704 = vmatpush1.bf16.msra.mxu0 %v503
    %705 = vmatprep.mubr.bf16.mxu0 %v63
    %706 = vmatmul.mubr.bf16.gmra.mrb[0].mxu0 %v62
    %v707 = vpop.f32.mrb[0].mxu0
    %v708 = vadd.f32 %v172, %v707
    %v709 = vpop.f32.mrb[0].mxu0
    %v710 = vadd.f32 %v176, %v709
    %v711 = vpop.f32.mrb[0].mxu0
    %v712 = vpop.f32.mrb[0].mxu0
    %713 = vdwg.mxu0
    %714 = vmatprep.subr.bf16.mxu0 %v506
    %715 = vmatpush1.bf16.msra.mxu0 %v505
    %716 = vmatprep.subr.bf16.mxu0 %v508
    %717 = vmatpush1.bf16.msra.mxu0 %v507
    %718 = vmatprep.subr.bf16.mxu0 %v510
    %719 = vmatpush1.bf16.msra.mxu0 %v509
    %720 = vmatprep.subr.bf16.mxu0 %v512
    %721 = vmatpush1.bf16.msra.mxu0 %v511
    %722 = vmatprep.subr.bf16.mxu0 %v514
    %723 = vmatpush1.bf16.msra.mxu0 %v513
    %724 = vmatprep.subr.bf16.mxu0 %v516
    %725 = vmatpush1.bf16.msra.mxu0 %v515
    %726 = vmatprep.subr.bf16.mxu0 %v518
    %727 = vmatpush1.bf16.msra.mxu0 %v517
    %728 = vmatprep.subr.bf16.mxu0 %v520
    %729 = vmatpush1.bf16.msra.mxu0 %v519
    %730 = vmatprep.subr.bf16.mxu0 %v522
    %731 = vmatpush1.bf16.msra.mxu0 %v521
    %732 = vmatprep.subr.bf16.mxu0 %v524
    %733 = vmatpush1.bf16.msra.mxu0 %v523
    %734 = vmatprep.subr.bf16.mxu0 %v526
    %735 = vmatpush1.bf16.msra.mxu0 %v525
    %736 = vmatprep.subr.bf16.mxu0 %v528
    %737 = vmatpush1.bf16.msra.mxu0 %v527
    %738 = vmatprep.subr.bf16.mxu0 %v530
    %739 = vmatpush1.bf16.msra.mxu0 %v529
    %740 = vmatprep.subr.bf16.mxu0 %v532
    %741 = vmatpush1.bf16.msra.mxu0 %v531
    %742 = vmatprep.subr.bf16.mxu0 %v534
    %743 = vmatpush1.bf16.msra.mxu0 %v533
    %744 = vmatprep.subr.bf16.mxu0 %v536
    %745 = vmatpush1.bf16.msra.mxu0 %v535
    %746 = vmatprep.mubr.bf16.mxu0 %v65
    %747 = vmatmul.mubr.bf16.gmra.mrb[0].mxu0 %v64
    %v748 = vpop.f32.mrb[0].mxu0
    %v749 = vadd.f32 %v708, %v748
    %v750 = vpop.f32.mrb[0].mxu0
    %v751 = vadd.f32 %v710, %v750
    %v752 = vpop.f32.mrb[0].mxu0
    %v753 = vpop.f32.mrb[0].mxu0
    %754 = vdwg.mxu0
    %755 = vmatprep.subr.bf16.mxu0 %v538
    %756 = vmatpush1.bf16.msra.mxu0 %v537
    %757 = vmatprep.subr.bf16.mxu0 %v540
    %758 = vmatpush1.bf16.msra.mxu0 %v539
    %759 = vmatprep.subr.bf16.mxu0 %v542
    %760 = vmatpush1.bf16.msra.mxu0 %v541
    %761 = vmatprep.subr.bf16.mxu0 %v544
    %762 = vmatpush1.bf16.msra.mxu0 %v543
    %763 = vmatprep.subr.bf16.mxu0 %v546
    %764 = vmatpush1.bf16.msra.mxu0 %v545
    %765 = vmatprep.subr.bf16.mxu0 %v548
    %766 = vmatpush1.bf16.msra.mxu0 %v547
    %767 = vmatprep.subr.bf16.mxu0 %v550
    %768 = vmatpush1.bf16.msra.mxu0 %v549
    %769 = vmatprep.subr.bf16.mxu0 %v552
    %770 = vmatpush1.bf16.msra.mxu0 %v551
    %771 = vmatprep.subr.bf16.mxu0 %v554
    %772 = vmatpush1.bf16.msra.mxu0 %v553
    %773 = vmatprep.subr.bf16.mxu0 %v556
    %774 = vmatpush1.bf16.msra.mxu0 %v555
    %775 = vmatprep.subr.bf16.mxu0 %v558
    %776 = vmatpush1.bf16.msra.mxu0 %v557
    %777 = vmatprep.subr.bf16.mxu0 %v560
    %778 = vmatpush1.bf16.msra.mxu0 %v559
    %779 = vmatprep.subr.bf16.mxu0 %v562
    %780 = vmatpush1.bf16.msra.mxu0 %v561
    %781 = vmatprep.subr.bf16.mxu0 %v564
    %782 = vmatpush1.bf16.msra.mxu0 %v563
    %783 = vmatprep.subr.bf16.mxu0 %v566
    %784 = vmatpush1.bf16.msra.mxu0 %v565
    %785 = vmatprep.subr.bf16.mxu0 %v568
    %786 = vmatpush1.bf16.msra.mxu0 %v567
    %787 = vmatprep.mubr.bf16.mxu0 %v67
    %788 = vmatmul.mubr.bf16.gmra.mrb[0].mxu0 %v66
    %v789 = vpop.f32.mrb[0].mxu0
    %v790 = vadd.f32 %v749, %v789
    %v791 = vpop.f32.mrb[0].mxu0
    %v792 = vadd.f32 %v751, %v791
    %v793 = vpop.f32.mrb[0].mxu0
    %v794 = vpop.f32.mrb[0].mxu0
    %795 = vdwg.mxu0
    %796 = vmatprep.subr.bf16.mxu0 %v570
    %797 = vmatpush1.bf16.msra.mxu0 %v569
    %798 = vmatprep.subr.bf16.mxu0 0
    %799 = vmatpush1.bf16.msra.mxu0 0
    %800 = vmatprep.subr.bf16.mxu0 0
    %801 = vmatpush1.bf16.msra.mxu0 0
    %802 = vmatprep.subr.bf16.mxu0 0
    %803 = vmatpush1.bf16.msra.mxu0 0
    %804 = vmatprep.subr.bf16.mxu0 0
    %805 = vmatpush1.bf16.msra.mxu0 0
    %806 = vmatprep.subr.bf16.mxu0 0
    %807 = vmatpush1.bf16.msra.mxu0 0
    %808 = vmatprep.subr.bf16.mxu0 0
    %809 = vmatpush1.bf16.msra.mxu0 0
    %810 = vmatprep.subr.bf16.mxu0 0
    %811 = vmatpush1.bf16.msra.mxu0 0
    %812 = vmatprep.subr.bf16.mxu0 0
    %813 = vmatpush1.bf16.msra.mxu0 0
    %814 = vmatprep.subr.bf16.mxu0 0
    %815 = vmatpush1.bf16.msra.mxu0 0
    %816 = vmatprep.subr.bf16.mxu0 0
    %817 = vmatpush1.bf16.msra.mxu0 0
    %818 = vmatprep.subr.bf16.mxu0 0
    %819 = vmatpush1.bf16.msra.mxu0 0
    %820 = vmatprep.subr.bf16.mxu0 0
    %821 = vmatpush1.bf16.msra.mxu0 0
    %822 = vmatprep.subr.bf16.mxu0 0
    %823 = vmatpush1.bf16.msra.mxu0 0
    %824 = vmatprep.subr.bf16.mxu0 0
    %825 = vmatpush1.bf16.msra.mxu0 0
    %826 = vmatprep.subr.bf16.mxu0 0
    %827 = vmatpush1.bf16.msra.mxu0 0
    %828 = vmatprep.mubr.bf16.mxu0 0
    %829 = vmatmul.mubr.bf16.gmra.mrb[0].mxu0 %v671
    %v830 = vpop.f32.mrb[0].mxu0
    %v831 = vadd.f32 %v790, %v830
    %v832 = vpop.f32.mrb[0].mxu0
    %v833 = vadd.f32 %v792, %v832
    %v834 = vpop.f32.mrb[0].mxu0
    %v835 = vpop.f32.mrb[0].mxu0
    %836 = vdwg.mxu0
    %v837 = vmax.f32 %v831, 0.0
    %v838 = vmax.f32 %v833, 0.0
    %v839 = vpack.c.bf16 %v837, %v837
    %v840 = vpack.c.bf16 %v838, %v838
    %v841 = vld [vmem:[%s3] sm:$0xff]
    %v842 = vld [vmem:[%s3 + $0x8] sm:$0xff]
    %v843 = vld [vmem:[%s3 + $0x10] sm:$0xff]
    %v844 = vld [vmem:[%s3 + $0x18] sm:$0xff]
    %v845 = vld [vmem:[%s3 + $0x20] sm:$0xff]
    %v846 = vld [vmem:[%s3 + $0x28] sm:$0xff]
    %v847 = vld [vmem:[%s3 + $0x30] sm:$0xff]
    %v848 = vld [vmem:[%s3 + $0x38] sm:$0xff]
    %v849 = vld [vmem:[%s3 + $0x40] sm:$0xff]
    %v850 = vld [vmem:[%s3 + $0x48] sm:$0xff]
    %v851 = vld [vmem:[%s3 + $0x50] sm:$0xff]
    %v852 = vld [vmem:[%s3 + $0x58] sm:$0xff]
    %v853 = vld [vmem:[%s3 + $0x60] sm:$0xff]
    %v854 = vld [vmem:[%s3 + $0x68] sm:$0xff]
    %v855 = vld [vmem:[%s3 + $0x70] sm:$0xff]
    %v856 = vld [vmem:[%s3 + $0x78] sm:$0xff]
    %v857 = vld [vmem:[%s3 + $0x80] sm:$0xff]
    %v858 = vld [vmem:[%s3 + $0x88] sm:$0xff]
    %v859 = vld [vmem:[%s3 + $0x90] sm:$0xff]
    %v860 = vld [vmem:[%s3 + $0x98] sm:$0xff]
    %v861 = vld [vmem:[%s3 + $0xa0] sm:$0xff]
    %v862 = vld [vmem:[%s3 + $0xa8] sm:$0xff]
    %v863 = vld [vmem:[%s3 + $0xb0] sm:$0xff]
    %v864 = vld [vmem:[%s3 + $0xb8] sm:$0xff]
    %v865 = vld [vmem:[%s3 + $0xc0] sm:$0xff]
    %v866 = vld [vmem:[%s3 + $0xc8] sm:$0xff]
    %v867 = vld [vmem:[%s3 + $0xd0] sm:$0xff]
    %v868 = vld [vmem:[%s3 + $0xd8] sm:$0xff]
    %v869 = vld [vmem:[%s3 + $0xe0] sm:$0xff]
    %v870 = vld [vmem:[%s3 + $0xe8] sm:$0xff]
    %v871 = vld [vmem:[%s3 + $0xf0] sm:$0xff]
    %v872 = vld [vmem:[%s3 + $0xf8] sm:$0xff]
    %v873 = vld [vmem:[%s4] sm:$0x3]
    %v875 = vlaneseq
    %v876 = vshrl.u32 %v875, 7
    %v877 = vsub.s32 0, %v876
    %v878 = vrot.slane %v873, %v877
    %v879 = vlaneseq
    %v880 = vshrl.u32 %v879, 7
    %v881 = vsub.s32 1, %v880
    %v882 = vrot.slane %v873, %v881
    %v917 = vunpack.c.l.b16 %v841
    %v918 = vunpack.c.h.b16 %v841
    %v919 = vunpack.c.l.b16 %v842
    %v920 = vunpack.c.h.b16 %v842
    %v921 = vunpack.c.l.b16 %v843
    %v922 = vunpack.c.h.b16 %v843
    %v923 = vunpack.c.l.b16 %v844
    %v924 = vunpack.c.h.b16 %v844
    %v925 = vunpack.c.l.b16 %v845
    %v926 = vunpack.c.h.b16 %v845
    %v927 = vunpack.c.l.b16 %v846
    %v928 = vunpack.c.h.b16 %v846
    %v929 = vunpack.c.l.b16 %v847
    %v930 = vunpack.c.h.b16 %v847
    %v931 = vunpack.c.l.b16 %v848
    %v932 = vunpack.c.h.b16 %v848
    %v933 = vunpack.c.l.b16 %v849
    %v934 = vunpack.c.h.b16 %v849
    %v935 = vunpack.c.l.b16 %v850
    %v936 = vunpack.c.h.b16 %v850
    %v937 = vunpack.c.l.b16 %v851
    %v938 = vunpack.c.h.b16 %v851
    %v939 = vunpack.c.l.b16 %v852
    %v940 = vunpack.c.h.b16 %v852
    %v941 = vunpack.c.l.b16 %v853
    %v942 = vunpack.c.h.b16 %v853
    %v943 = vunpack.c.l.b16 %v854
    %v944 = vunpack.c.h.b16 %v854
    %v945 = vunpack.c.l.b16 %v855
    %v946 = vunpack.c.h.b16 %v855
    %v947 = vunpack.c.l.b16 %v856
    %v948 = vunpack.c.h.b16 %v856
    %v949 = vunpack.c.l.b16 %v857
    %v950 = vunpack.c.h.b16 %v857
    %v951 = vunpack.c.l.b16 %v858
    %v952 = vunpack.c.h.b16 %v858
    %v953 = vunpack.c.l.b16 %v859
    %v954 = vunpack.c.h.b16 %v859
    %v955 = vunpack.c.l.b16 %v860
    %v956 = vunpack.c.h.b16 %v860
    %v957 = vunpack.c.l.b16 %v861
    %v958 = vunpack.c.h.b16 %v861
    %v959 = vunpack.c.l.b16 %v862
    %v960 = vunpack.c.h.b16 %v862
    %v961 = vunpack.c.l.b16 %v863
    %v962 = vunpack.c.h.b16 %v863
    %v963 = vunpack.c.l.b16 %v864
    %v964 = vunpack.c.h.b16 %v864
    %v965 = vunpack.c.l.b16 %v865
    %v966 = vunpack.c.h.b16 %v865
    %v967 = vunpack.c.l.b16 %v866
    %v968 = vunpack.c.h.b16 %v866
    %v969 = vunpack.c.l.b16 %v867
    %v970 = vunpack.c.h.b16 %v867
    %v971 = vunpack.c.l.b16 %v868
    %v972 = vunpack.c.h.b16 %v868
    %v973 = vunpack.c.l.b16 %v869
    %v974 = vunpack.c.h.b16 %v869
    %v975 = vunpack.c.l.b16 %v870
    %v976 = vunpack.c.h.b16 %v870
    %v977 = vunpack.c.l.b16 %v871
    %v978 = vunpack.c.h.b16 %v871
    %v979 = vunpack.c.l.b16 %v872
    %v980 = vunpack.c.h.b16 %v872
    %v981 = vpack.c.b16 %v919, %v917
    %v982 = vpack.c.b16 %v920, %v918
    %v983 = vpack.c.b16 %v923, %v921
    %v984 = vpack.c.b16 %v924, %v922
    %v985 = vpack.c.b16 %v927, %v925
    %v986 = vpack.c.b16 %v928, %v926
    %v987 = vpack.c.b16 %v931, %v929
    %v988 = vpack.c.b16 %v932, %v930
    %v989 = vpack.c.b16 %v935, %v933
    %v990 = vpack.c.b16 %v936, %v934
    %v991 = vpack.c.b16 %v939, %v937
    %v992 = vpack.c.b16 %v940, %v938
    %v993 = vpack.c.b16 %v943, %v941
    %v994 = vpack.c.b16 %v944, %v942
    %v995 = vpack.c.b16 %v947, %v945
    %v996 = vpack.c.b16 %v948, %v946
    %v997 = vpack.c.b16 %v951, %v949
    %v998 = vpack.c.b16 %v952, %v950
    %v999 = vpack.c.b16 %v955, %v953
    %v1000 = vpack.c.b16 %v956, %v954
    %v1001 = vpack.c.b16 %v959, %v957
    %v1002 = vpack.c.b16 %v960, %v958
    %v1003 = vpack.c.b16 %v963, %v961
    %v1004 = vpack.c.b16 %v964, %v962
    %v1005 = vpack.c.b16 %v967, %v965
    %v1006 = vpack.c.b16 %v968, %v966
    %v1007 = vpack.c.b16 %v971, %v969
    %v1008 = vpack.c.b16 %v972, %v970
    %v1009 = vpack.c.b16 %v975, %v973
    %v1010 = vpack.c.b16 %v976, %v974
    %v1011 = vpack.c.b16 %v979, %v977
    %v1012 = vpack.c.b16 %v980, %v978
    %1045 = vmatprep.subr.bf16.mxu0 %v982
    %1046 = vmatpush1.bf16.msra.mxu0 %v981
    %1047 = vmatprep.subr.bf16.mxu0 %v984
    %1048 = vmatpush1.bf16.msra.mxu0 %v983
    %1049 = vmatprep.subr.bf16.mxu0 %v986
    %1050 = vmatpush1.bf16.msra.mxu0 %v985
    %1051 = vmatprep.subr.bf16.mxu0 %v988
    %1052 = vmatpush1.bf16.msra.mxu0 %v987
    %1053 = vmatprep.subr.bf16.mxu0 %v990
    %1054 = vmatpush1.bf16.msra.mxu0 %v989
    %1055 = vmatprep.subr.bf16.mxu0 %v992
    %1056 = vmatpush1.bf16.msra.mxu0 %v991
    %1057 = vmatprep.subr.bf16.mxu0 %v994
    %1058 = vmatpush1.bf16.msra.mxu0 %v993
    %1059 = vmatprep.subr.bf16.mxu0 %v996
    %1060 = vmatpush1.bf16.msra.mxu0 %v995
    %1061 = vmatprep.subr.bf16.mxu0 %v998
    %1062 = vmatpush1.bf16.msra.mxu0 %v997
    %1063 = vmatprep.subr.bf16.mxu0 %v1000
    %1064 = vmatpush1.bf16.msra.mxu0 %v999
    %1065 = vmatprep.subr.bf16.mxu0 %v1002
    %1066 = vmatpush1.bf16.msra.mxu0 %v1001
    %1067 = vmatprep.subr.bf16.mxu0 %v1004
    %1068 = vmatpush1.bf16.msra.mxu0 %v1003
    %1069 = vmatprep.subr.bf16.mxu0 %v1006
    %1070 = vmatpush1.bf16.msra.mxu0 %v1005
    %1071 = vmatprep.subr.bf16.mxu0 %v1008
    %1072 = vmatpush1.bf16.msra.mxu0 %v1007
    %1073 = vmatprep.subr.bf16.mxu0 %v1010
    %1074 = vmatpush1.bf16.msra.mxu0 %v1009
    %1075 = vmatprep.subr.bf16.mxu0 %v1012
    %1076 = vmatpush1.bf16.msra.mxu0 %v1011
    %1077 = vmatprep.mubr.bf16.mxu0 %v840
    %1078 = vmatmul.mubr.bf16.gmra.mrb[0].mxu0 %v839
    %v1079 = vpop.f32.mrb[0].mxu0
    %v1080 = vadd.f32 %v878, %v1079
    %v1081 = vpop.f32.mrb[0].mxu0
    %v1082 = vadd.f32 %v882, %v1081
    %v1083 = vpop.f32.mrb[0].mxu0
    %v1084 = vpop.f32.mrb[0].mxu0
    %1085 = vdwg.mxu0
    %v1086 = vmax.f32 %v1080, 0.0
    %v1087 = vmax.f32 %v1082, 0.0
    %v1088 = vpack.c.bf16 %v1086, %v1086
    %v1089 = vpack.c.bf16 %v1087, %v1087
    %v1090 = vld [vmem:[#allocation4] sm:$0xff]
    %v1091 = vld [vmem:[#allocation4 + $0x8] sm:$0xff]
    %v1092 = vld [vmem:[#allocation4 + $0x10] sm:$0xff]
    %v1093 = vld [vmem:[#allocation4 + $0x18] sm:$0xff]
    %v1094 = vld [vmem:[#allocation4 + $0x20] sm:$0xff]
    %v1095 = vld [vmem:[#allocation4 + $0x28] sm:$0xff]
    %v1096 = vld [vmem:[#allocation4 + $0x30] sm:$0xff]
    %v1097 = vld [vmem:[#allocation4 + $0x38] sm:$0xff]
    %v1098 = vld [vmem:[#allocation4 + $0x40] sm:$0xff]
    %v1099 = vld [vmem:[#allocation4 + $0x48] sm:$0xff]
    %v1100 = vld [vmem:[#allocation4 + $0x50] sm:$0xff]
    %v1101 = vld [vmem:[#allocation4 + $0x58] sm:$0xff]
    %v1102 = vld [vmem:[#allocation4 + $0x60] sm:$0xff]
    %v1103 = vld [vmem:[#allocation4 + $0x68] sm:$0xff]
    %v1104 = vld [vmem:[#allocation4 + $0x70] sm:$0xff]
    %v1105 = vld [vmem:[#allocation4 + $0x78] sm:$0xff]
    %v1106 = vld [vmem:[#allocation4 + $0x80] sm:$0xff]
    %v1107 = vld [vmem:[#allocation4 + $0x88] sm:$0xff]
    %v1108 = vld [vmem:[#allocation4 + $0x90] sm:$0xff]
    %v1109 = vld [vmem:[#allocation4 + $0x98] sm:$0xff]
    %v1110 = vld [vmem:[#allocation4 + $0xa0] sm:$0xff]
    %v1111 = vld [vmem:[#allocation4 + $0xa8] sm:$0xff]
    %v1112 = vld [vmem:[#allocation4 + $0xb0] sm:$0xff]
    %v1113 = vld [vmem:[#allocation4 + $0xb8] sm:$0xff]
    %v1114 = vld [vmem:[#allocation4 + $0xc0] sm:$0xff]
    %v1115 = vld [vmem:[#allocation4 + $0xc8] sm:$0xff]
    %v1116 = vld [vmem:[#allocation4 + $0xd0] sm:$0xff]
    %v1117 = vld [vmem:[#allocation4 + $0xd8] sm:$0xff]
    %v1118 = vld [vmem:[#allocation4 + $0xe0] sm:$0xff]
    %v1119 = vld [vmem:[#allocation4 + $0xe8] sm:$0xff]
    %v1120 = vld [vmem:[#allocation4 + $0xf0] sm:$0xff]
    %v1121 = vld [vmem:[#allocation4 + $0xf8] sm:$0xff]
    %v1122 = vld [vmem:[%s6] sm:$0x3]
    %v1124 = vlaneseq
    %v1125 = vshrl.u32 %v1124, 7
    %v1126 = vsub.s32 0, %v1125
    %v1127 = vrot.slane %v1122, %v1126
    %v1128 = vlaneseq
    %v1129 = vshrl.u32 %v1128, 7
    %v1130 = vsub.s32 1, %v1129
    %v1131 = vrot.slane %v1122, %v1130
    %v1166 = vunpack.c.l.b16 %v1090
    %v1167 = vunpack.c.h.b16 %v1090
    %v1168 = vunpack.c.l.b16 %v1091
    %v1169 = vunpack.c.h.b16 %v1091
    %v1170 = vunpack.c.l.b16 %v1092
    %v1171 = vunpack.c.h.b16 %v1092
    %v1172 = vunpack.c.l.b16 %v1093
    %v1173 = vunpack.c.h.b16 %v1093
    %v1174 = vunpack.c.l.b16 %v1094
    %v1175 = vunpack.c.h.b16 %v1094
    %v1176 = vunpack.c.l.b16 %v1095
    %v1177 = vunpack.c.h.b16 %v1095
    %v1178 = vunpack.c.l.b16 %v1096
    %v1179 = vunpack.c.h.b16 %v1096
    %v1180 = vunpack.c.l.b16 %v1097
    %v1181 = vunpack.c.h.b16 %v1097
    %v1182 = vunpack.c.l.b16 %v1098
    %v1183 = vunpack.c.h.b16 %v1098
    %v1184 = vunpack.c.l.b16 %v1099
    %v1185 = vunpack.c.h.b16 %v1099
    %v1186 = vunpack.c.l.b16 %v1100
    %v1187 = vunpack.c.h.b16 %v1100
    %v1188 = vunpack.c.l.b16 %v1101
    %v1189 = vunpack.c.h.b16 %v1101
    %v1190 = vunpack.c.l.b16 %v1102
    %v1191 = vunpack.c.h.b16 %v1102
    %v1192 = vunpack.c.l.b16 %v1103
    %v1193 = vunpack.c.h.b16 %v1103
    %v1194 = vunpack.c.l.b16 %v1104
    %v1195 = vunpack.c.h.b16 %v1104
    %v1196 = vunpack.c.l.b16 %v1105
    %v1197 = vunpack.c.h.b16 %v1105
    %v1198 = vunpack.c.l.b16 %v1106
    %v1199 = vunpack.c.h.b16 %v1106
    %v1200 = vunpack.c.l.b16 %v1107
    %v1201 = vunpack.c.h.b16 %v1107
    %v1202 = vunpack.c.l.b16 %v1108
    %v1203 = vunpack.c.h.b16 %v1108
    %v1204 = vunpack.c.l.b16 %v1109
    %v1205 = vunpack.c.h.b16 %v1109
    %v1206 = vunpack.c.l.b16 %v1110
    %v1207 = vunpack.c.h.b16 %v1110
    %v1208 = vunpack.c.l.b16 %v1111
    %v1209 = vunpack.c.h.b16 %v1111
    %v1210 = vunpack.c.l.b16 %v1112
    %v1211 = vunpack.c.h.b16 %v1112
    %v1212 = vunpack.c.l.b16 %v1113
    %v1213 = vunpack.c.h.b16 %v1113
    %v1214 = vunpack.c.l.b16 %v1114
    %v1215 = vunpack.c.h.b16 %v1114
    %v1216 = vunpack.c.l.b16 %v1115
    %v1217 = vunpack.c.h.b16 %v1115
    %v1218 = vunpack.c.l.b16 %v1116
    %v1219 = vunpack.c.h.b16 %v1116
    %v1220 = vunpack.c.l.b16 %v1117
    %v1221 = vunpack.c.h.b16 %v1117
    %v1222 = vunpack.c.l.b16 %v1118
    %v1223 = vunpack.c.h.b16 %v1118
    %v1224 = vunpack.c.l.b16 %v1119
    %v1225 = vunpack.c.h.b16 %v1119
    %v1226 = vunpack.c.l.b16 %v1120
    %v1227 = vunpack.c.h.b16 %v1120
    %v1228 = vunpack.c.l.b16 %v1121
    %v1229 = vunpack.c.h.b16 %v1121
    %v1230 = vpack.c.b16 %v1168, %v1166
    %v1231 = vpack.c.b16 %v1169, %v1167
    %v1232 = vpack.c.b16 %v1172, %v1170
    %v1233 = vpack.c.b16 %v1173, %v1171
    %v1234 = vpack.c.b16 %v1176, %v1174
    %v1235 = vpack.c.b16 %v1177, %v1175
    %v1236 = vpack.c.b16 %v1180, %v1178
    %v1237 = vpack.c.b16 %v1181, %v1179
    %v1238 = vpack.c.b16 %v1184, %v1182
    %v1239 = vpack.c.b16 %v1185, %v1183
    %v1240 = vpack.c.b16 %v1188, %v1186
    %v1241 = vpack.c.b16 %v1189, %v1187
    %v1242 = vpack.c.b16 %v1192, %v1190
    %v1243 = vpack.c.b16 %v1193, %v1191
    %v1244 = vpack.c.b16 %v1196, %v1194
    %v1245 = vpack.c.b16 %v1197, %v1195
    %v1246 = vpack.c.b16 %v1200, %v1198
    %v1247 = vpack.c.b16 %v1201, %v1199
    %v1248 = vpack.c.b16 %v1204, %v1202
    %v1249 = vpack.c.b16 %v1205, %v1203
    %v1250 = vpack.c.b16 %v1208, %v1206
    %v1251 = vpack.c.b16 %v1209, %v1207
    %v1252 = vpack.c.b16 %v1212, %v1210
    %v1253 = vpack.c.b16 %v1213, %v1211
    %v1254 = vpack.c.b16 %v1216, %v1214
    %v1255 = vpack.c.b16 %v1217, %v1215
    %v1256 = vpack.c.b16 %v1220, %v1218
    %v1257 = vpack.c.b16 %v1221, %v1219
    %v1258 = vpack.c.b16 %v1224, %v1222
    %v1259 = vpack.c.b16 %v1225, %v1223
    %v1260 = vpack.c.b16 %v1228, %v1226
    %v1261 = vpack.c.b16 %v1229, %v1227
    %1294 = vmatprep.subr.bf16.mxu0 %v1231
    %1295 = vmatpush1.bf16.msra.mxu0 %v1230
    %1296 = vmatprep.subr.bf16.mxu0 %v1233
    %1297 = vmatpush1.bf16.msra.mxu0 %v1232
    %1298 = vmatprep.subr.bf16.mxu0 %v1235
    %1299 = vmatpush1.bf16.msra.mxu0 %v1234
    %1300 = vmatprep.subr.bf16.mxu0 %v1237
    %1301 = vmatpush1.bf16.msra.mxu0 %v1236
    %1302 = vmatprep.subr.bf16.mxu0 %v1239
    %1303 = vmatpush1.bf16.msra.mxu0 %v1238
    %1304 = vmatprep.subr.bf16.mxu0 %v1241
    %1305 = vmatpush1.bf16.msra.mxu0 %v1240
    %1306 = vmatprep.subr.bf16.mxu0 %v1243
    %1307 = vmatpush1.bf16.msra.mxu0 %v1242
    %1308 = vmatprep.subr.bf16.mxu0 %v1245
    %1309 = vmatpush1.bf16.msra.mxu0 %v1244
    %1310 = vmatprep.subr.bf16.mxu0 %v1247
    %1311 = vmatpush1.bf16.msra.mxu0 %v1246
    %1312 = vmatprep.subr.bf16.mxu0 %v1249
    %1313 = vmatpush1.bf16.msra.mxu0 %v1248
    %1314 = vmatprep.subr.bf16.mxu0 %v1251
    %1315 = vmatpush1.bf16.msra.mxu0 %v1250
    %1316 = vmatprep.subr.bf16.mxu0 %v1253
    %1317 = vmatpush1.bf16.msra.mxu0 %v1252
    %1318 = vmatprep.subr.bf16.mxu0 %v1255
    %1319 = vmatpush1.bf16.msra.mxu0 %v1254
    %1320 = vmatprep.subr.bf16.mxu0 %v1257
    %1321 = vmatpush1.bf16.msra.mxu0 %v1256
    %1322 = vmatprep.subr.bf16.mxu0 %v1259
    %1323 = vmatpush1.bf16.msra.mxu0 %v1258
    %1324 = vmatprep.subr.bf16.mxu0 %v1261
    %1325 = vmatpush1.bf16.msra.mxu0 %v1260
    %1326 = vmatprep.mubr.bf16.mxu0 %v1089
    %1327 = vmatmul.mubr.bf16.gmra.mrb[0].mxu0 %v1088
    %v1328 = vpop.f32.mrb[0].mxu0
    %v1329 = vadd.f32 %v1127, %v1328
    %v1330 = vpop.f32.mrb[0].mxu0
    %v1331 = vadd.f32 %v1131, %v1330
    %v1332 = vpop.f32.mrb[0].mxu0
    %v1333 = vpop.f32.mrb[0].mxu0
    %1334 = vdwg.mxu0
    %1335 = vst [vmem:[%s7] sm:$0xff] %v1329
    %1336 = vst [vmem:[%s7 + $0x8] sm:$0xff] %v1331
    // Predicated region
    $region38: #{tst_forward.1} parent=1 // pred_check
      _
    $region39: #{tst_forward.1} parent=1 // pred_check_branch
      %1338 = sbr.rel (0) target = $region41
    $region40: #{tst_forward.1} parent=1 // pred_region
      _
    $region41: #{tst_forward.1} parent=1 // pred_fallthru
      _
    // Predicated region
    $region42: #{tst_forward.1} parent=1 // pred_check
      _
    $region43: #{tst_forward.1} parent=1 // pred_check_branch
      %1340 = sbr.rel (0) target = $region45
    $region44: #{tst_forward.1} parent=1 // pred_region
      _
    $region45: #{tst_forward.1} parent=1 // pred_fallthru
      _
    %1341 = vsyncpa [#allocation3], 1
    %1342 = vsyncpa [#allocation5], 1

</llo_original>
